<compile_context>
chip_gen: v6e
topology: v6e:2x2x1
jax: 0.10.0
libtpu: 0.0.40
codegen_flags: <defaults>
</compile_context>

<pallas_src>
import functools

import jax
import jax.numpy as jnp
import numpy as np
from jax.experimental import pallas as pl
from jax.experimental.pallas import tpu as pltpu


def _mixup_ce_kernel(*refs, dhw, tile_p, inner_tiles, needs_mask, scalar_lam):
    """Grid = (N, P_outer, P_inner); the inner pixel axis is the accumulation axis.

    refs (scalar_lam=False): logits (C, TP), tgt (3, TP) = [y1, y2, lambda], out (1, TP)
    refs (scalar_lam=True) : lam (N, 1) f32 in SMEM, logits (C, TP), tgt (2, TP), out (1, TP)
    """
    if scalar_lam:
        lam_ref, logits_ref, tgt_ref, out_ref = refs
    else:
        logits_ref, tgt_ref, out_ref = refs

    pi = pl.program_id(2)

    # The output block index is constant over the inner axis -> the block stays
    # resident in VMEM; accumulate straight into it (no scratch accumulator).
    @pl.when(pi == 0)
    def _():
        out_ref[...] = jnp.zeros_like(out_ref)

    x = logits_ref[...].astype(jnp.float32)              # (C, TP)
    tgt = tgt_ref[...]                                    # (3|2, TP) f32
    y1 = tgt[0:1, :].astype(jnp.int32)                    # truncation == .long() (labels >= 0)
    y2 = tgt[1:2, :].astype(jnp.int32)
    if scalar_lam:
        lam = lam_ref[pl.program_id(0), 0]                # per-sample scalar from SMEM
    else:
        lam = tgt[2:3, :]                                 # per-voxel lambda plane

    # log-sum-exp per pixel (reduce over channel / sublane axis)
    m = jnp.max(x, axis=0, keepdims=True)                 # (1, TP)
    lse = m + jnp.log(jnp.sum(jnp.exp(x - m), axis=0, keepdims=True))

    # Fused one-hot gather of the mixed target logit (single sublane reduce):
    #   logit_mix = lam * logit[y1] + (1 - lam) * logit[y2]
    cls = jax.lax.broadcasted_iota(jnp.int32, x.shape, 0)
    w = jnp.where(cls == y1, lam, 0.0) + jnp.where(cls == y2, 1.0 - lam, 0.0)
    mixed = lse - jnp.sum(x * w, axis=0, keepdims=True)   # (1, TP)

    if needs_mask:
        po = pl.program_id(1)
        t = po * inner_tiles + pi                          # global pixel-tile index

        @pl.when((t + 1) * tile_p <= dhw)
        def _():                                           # full interior tile: no mask
            out_ref[...] += mixed

        @pl.when((t + 1) * tile_p > dhw)
        def _():                                           # ragged / fully out-of-range tile
            lane = jax.lax.broadcasted_iota(jnp.int32, (1, tile_p), 1)
            valid = (t * tile_p + lane) < dhw
            # select() does not propagate NaN/garbage from padded lanes.
            out_ref[...] += jnp.where(valid, mixed, 0.0)
    else:
        out_ref[...] += mixed


def mixup_ce_loss_pallas(logits_ncp, tgt_ncp, lam_n=None, *, tile_p=None,
                         vmem_budget_bytes=12 * 1024 * 1024,
                         max_tile_p=128 * 1024, outer_split=2):
    """logits_ncp: (N, C, P) float (f32 or bf16); tgt_ncp: (N, 3, P) f32 holding
    (y1, y2, lambda) planes, or (N, 2, P) label planes when lam_n (N,) is given.
    Returns the scalar mean over all N*P voxels of the mixed cross-entropy."""
    N, C, P = logits_ncp.shape
    scalar_lam = lam_n is not None
    t_rows = 2 if scalar_lam else 3

    # --- tile size derived from a VMEM budget (C- and dtype-aware), not fixed.
    if tile_p is None:
        logit_bytes = logits_ncp.dtype.itemsize
        # double-buffered input blocks + (x2 for safety) the f32 output row
        per_lane = 2 * (C * logit_bytes + t_rows * 4) + 2 * 4
        tile_p = vmem_budget_bytes // per_lane
        tile_p = min(tile_p, max_tile_p)
    if P >= 128:
        tile_p = max(128, min(int(tile_p), P))
        tile_p = (tile_p // 128) * 128                     # lane multiple
    else:
        tile_p = int(P)                                    # tiny volume: full-dim block

    num_tiles = -(-P // tile_p)
    outer = max(1, min(int(outer_split), num_tiles))       # megacore pixel chunks (v7x)
    inner = -(-num_tiles // outer)
    needs_mask = (P % tile_p != 0) or (outer * inner != num_tiles)
    last_tile = num_tiles - 1

    def pix_idx(po, pi):
        t = po * inner + pi
        if outer * inner == num_tiles:
            return t
        # clamp fully-out-of-range tiles; the in-kernel mask zeroes their lanes
        return jnp.minimum(t, last_tile)

    in_specs = [
        pl.BlockSpec((None, C, tile_p), lambda n, po, pi: (n, 0, pix_idx(po, pi))),
        pl.BlockSpec((None, t_rows, tile_p), lambda n, po, pi: (n, 0, pix_idx(po, pi))),
    ]
    args = [logits_ncp, tgt_ncp]
    if scalar_lam:
        in_specs = [pl.BlockSpec(memory_space=pltpu.MemorySpace.SMEM)] + in_specs
        args = [jnp.reshape(lam_n.astype(jnp.float32), (N, 1))] + args

    kernel = functools.partial(
        _mixup_ce_kernel, dhw=P, tile_p=tile_p, inner_tiles=inner,
        needs_mask=needs_mask, scalar_lam=scalar_lam)

    partial_sums = pl.pallas_call(
        kernel,
        out_shape=jax.ShapeDtypeStruct((N, outer, tile_p), jnp.float32),
        grid_spec=pltpu.PrefetchScalarGridSpec(
            num_scalar_prefetch=0,
            grid=(N, outer, inner),
            in_specs=in_specs,
            out_specs=pl.BlockSpec((None, 1, tile_p), lambda n, po, pi: (n, po, 0)),
        ),
        compiler_params=pltpu.CompilerParams(
            dimension_semantics=("parallel", "parallel", "arbitrary"),
            vmem_limit_bytes=32 * 1024 * 1024),
    )(*args)

    # single tiny cross-lane reduce + true-count mean in XLA
    return jnp.sum(partial_sums) / jnp.float32(N * P)


def mixup_loss_forward(output, target, reduction="mean", *, tile_p=None,
                       assume_scalar_lambda=False):
    """JAX/Pallas equivalent of MixUpLoss.forward with crit = per-voxel
    cross-entropy (reduction forced to 'none').

    assume_scalar_lambda=True opts into the fast path that streams only the two
    label planes and reads a per-sample lambda from SMEM (valid when
    target[:, 2] is constant per sample, as standard mixup produces)."""
    if target.ndim >= 5:
        N, C = output.shape[0], output.shape[1]
        dhw = int(np.prod(output.shape[2:]))

        # Free, contiguous reshapes only -- no transpose / moveaxis HBM copies,
        # no wrapper-side dtype pass over the big logit slab (bf16 stays bf16).
        logits = jnp.reshape(output, (N, C, dhw))
        if assume_scalar_lambda:
            tgt = jnp.reshape(target[:, :2].astype(jnp.float32), (N, 2, dhw))
            lam = jnp.reshape(target[:, 2], (N, dhw))[:, 0].astype(jnp.float32)
            d = mixup_ce_loss_pallas(logits, tgt, lam, tile_p=tile_p)
        else:
            tgt = jnp.reshape(target[:, :3].astype(jnp.float32), (N, 3, dhw))
            d = mixup_ce_loss_pallas(logits, tgt, tile_p=tile_p)
    else:
        # non-mixup branch: plain per-voxel CE in JAX glue (nothing to fuse).
        # TODO(synk): route through the same kernel with lam=1, y2=y1 if this
        # branch ever becomes hot.
        logp = jax.nn.log_softmax(output.astype(jnp.float32), axis=1)
        d = -jnp.take_along_axis(
            logp, target.astype(jnp.int32)[:, None], axis=1)[:, 0]

    if reduction == "mean":
        return jnp.mean(d)
    elif reduction == "sum":
        return jnp.sum(d)
    return d


def _reference(output, target):
    """Pure-JAX reference of the mixup branch for a correctness check."""
    logp = jax.nn.log_softmax(output.astype(jnp.float32), axis=1)
    y1 = target[:, 0].astype(jnp.int32)
    y2 = target[:, 1].astype(jnp.int32)
    lam = jnp.reshape(target[:, 2].astype(jnp.float32), (-1,))
    l1 = jnp.reshape(-jnp.take_along_axis(logp, y1[:, None], axis=1)[:, 0], (-1,))
    l2 = jnp.reshape(-jnp.take_along_axis(logp, y2[:, None], axis=1)[:, 0], (-1,))
    d = jnp.mean(l1 * lam + l2 * (1.0 - lam))
    return jnp.mean(d)


def _make_inputs(key, N, C, D, H, W):
    k_out, k_y1, k_y2, k_lam = jax.random.split(key, 4)
    output = jax.random.normal(k_out, (N, C, D, H, W), dtype=jnp.float32)
    y1 = jax.random.randint(k_y1, (N, D, H, W), 0, C)
    y2 = jax.random.randint(k_y2, (N, D, H, W), 0, C)
    lam = jax.random.uniform(k_lam, (N,), dtype=jnp.float32)
    lam_map = jnp.broadcast_to(lam[:, None, None, None], (N, D, H, W))
    # (N, 3, D, H, W) float32, ndim == 5 -> mixup branch
    target = jnp.stack(
        [y1.astype(jnp.float32), y2.astype(jnp.float32), lam_map], axis=1)
    return output, target


if __name__ == "__main__":
    key = jax.random.PRNGKey(0)
    k_a, k_b = jax.random.split(key)

    # Case A: D*H*W = 256 -> single full-width tile, ragged mask compiled out.
    out_a, tgt_a = _make_inputs(k_a, 2, 4, 4, 8, 8)
    loss_a = jax.block_until_ready(mixup_loss_forward(out_a, tgt_a))
    ref_a = jax.block_until_ready(_reference(out_a, tgt_a))
    np.testing.assert_allclose(np.asarray(loss_a), np.asarray(ref_a),
                               rtol=1e-5, atol=1e-5)

    # Case B: D*H*W = 288 with tile_p=128 -> 3 pixel tiles split 2 (parallel) x
    # 2 (arbitrary): exercises the ragged-tile mask, the clamped out-of-range
    # tile and the megacore pixel split / direct-output accumulation.
    out_b, tgt_b = _make_inputs(k_b, 2, 4, 4, 8, 9)
    loss_b = jax.block_until_ready(mixup_loss_forward(out_b, tgt_b, tile_p=128))
    ref_b = jax.block_until_ready(_reference(out_b, tgt_b))
    np.testing.assert_allclose(np.asarray(loss_b), np.asarray(ref_b),
                               rtol=1e-5, atol=1e-5)

    # Case C: per-sample-lambda fast path (streams only 2 label planes + SMEM
    # lambda); lambda is per-sample constant in these inputs.
    loss_c = jax.block_until_ready(
        mixup_loss_forward(out_b, tgt_b, tile_p=128, assume_scalar_lambda=True))
    np.testing.assert_allclose(np.asarray(loss_c), np.asarray(ref_b),
                               rtol=1e-5, atol=1e-5)

    print("KERNEL_OK")
</pallas_src>

<mosaic_0001>
module attributes {stable_mosaic.version = 11 : i64} {
  func.func @_mixup_ce_kernel(%arg0: i32, %arg1: i32, %arg2: i32, %arg3: memref<1x4x256xf32, #tpu.memory_space<vmem>>, %arg4: memref<1x3x256xf32, #tpu.memory_space<vmem>>, %arg5: memref<1x1x256xf32, #tpu.memory_space<vmem>>) attributes {dimension_semantics = [#tpu.dimension_semantics<parallel>, #tpu.dimension_semantics<parallel>, #tpu.dimension_semantics<arbitrary>], iteration_bounds = array<i64: 2, 1, 1>, scalar_prefetch = 0 : i64, scratch_operands = 0 : i64, tpu.core_type = #tpu.core_type<tc>, window_params = [{transform_indices = @transform_0, window_bounds = array<i64: 1, 4, 256>}, {transform_indices = @transform_1, window_bounds = array<i64: 1, 3, 256>}, {transform_indices = @transform_2, window_bounds = array<i64: 1, 1, 256>}]} {
    %c0_i32 = arith.constant 0 : i32
    %0 = arith.cmpi eq, %arg2, %c0_i32 : i32
    %1 = arith.extui %0 : i1 to i32
    %c0_i32_0 = arith.constant 0 : i32
    %2 = arith.cmpi ne, %1, %c0_i32_0 : i32
    scf.if %2 {
      %cst_17 = arith.constant 0.000000e+00 : f32
      %47 = vector.broadcast %cst_17 : f32 to vector<1x256xf32>
      %c0_18 = arith.constant 0 : index
      %c0_19 = arith.constant 0 : index
      %c0_20 = arith.constant 0 : index
      %48 = vector.load %arg5[%c0_18, %c0_19, %c0_20] : memref<1x1x256xf32, #tpu.memory_space<vmem>>, vector<1x1x256xf32>
      %49 = vector.shape_cast %48 : vector<1x1x256xf32> to vector<1x256xf32>
      %50 = vector.shape_cast %47 : vector<1x256xf32> to vector<1x1x256xf32>
      tpu.vector_store %arg5[%c0_18, %c0_19, %c0_20], %50 {strides = array<i32>} : memref<1x1x256xf32, #tpu.memory_space<vmem>>, vector<1x1x256xf32>,
    } else {
    }
    %c0 = arith.constant 0 : index
    %c0_1 = arith.constant 0 : index
    %c0_2 = arith.constant 0 : index
    %3 = vector.load %arg3[%c0, %c0_1, %c0_2] : memref<1x4x256xf32, #tpu.memory_space<vmem>>, vector<1x4x256xf32>
    %4 = vector.shape_cast %3 : vector<1x4x256xf32> to vector<4x256xf32>
    %c0_3 = arith.constant 0 : index
    %c0_4 = arith.constant 0 : index
    %c0_5 = arith.constant 0 : index
    %5 = vector.load %arg4[%c0_3, %c0_4, %c0_5] : memref<1x3x256xf32, #tpu.memory_space<vmem>>, vector<1x3x256xf32>
    %6 = vector.shape_cast %5 : vector<1x3x256xf32> to vector<3x256xf32>
    %7 = vector.extract_strided_slice %6 {offsets = [0, 0], sizes = [1, 256], strides = [1, 1]} : vector<3x256xf32> to vector<1x256xf32>
    %8 = arith.fptosi %7 : vector<1x256xf32> to vector<1x256xi32>
    %9 = vector.extract_strided_slice %6 {offsets = [1, 0], sizes = [1, 256], strides = [1, 1]} : vector<3x256xf32> to vector<1x256xf32>
    %10 = arith.fptosi %9 : vector<1x256xf32> to vector<1x256xi32>
    %11 = vector.extract_strided_slice %6 {offsets = [2, 0], sizes = [1, 256], strides = [1, 1]} : vector<3x256xf32> to vector<1x256xf32>
    %cst = arith.constant dense<0xFF800000> : vector<256xf32>
    %12 = vector.multi_reduction <maximumf>, %4, %cst [0] : vector<4x256xf32> to vector<256xf32>
    %13 = vector.shape_cast %12 : vector<256xf32> to vector<1x256xf32>
    %14 = vector.broadcast %13 : vector<1x256xf32> to vector<4x256xf32>
    %15 = arith.subf %4, %14 : vector<4x256xf32>
    %16 = math.exp %15 : vector<4x256xf32>
    %cst_6 = arith.constant dense<0.000000e+00> : vector<256xf32>
    %17 = vector.multi_reduction <add>, %16, %cst_6 [0] : vector<4x256xf32> to vector<256xf32>
    %18 = vector.shape_cast %17 : vector<256xf32> to vector<1x256xf32>
    %19 = math.log %18 : vector<1x256xf32>
    %20 = arith.addf %13, %19 : vector<1x256xf32>
    %21 = tpu.iota {dimensions = array<i32: 0>} : vector<4x256xi32>
    %22 = vector.broadcast %8 : vector<1x256xi32> to vector<4x256xi32>
    %23 = arith.cmpi eq, %21, %22 : vector<4x256xi32>
    %cst_7 = arith.constant 0.000000e+00 : f32
    %24 = vector.shape_cast %11 : vector<1x256xf32> to vector<1x256xf32>
    %25 = vector.broadcast %24 : vector<1x256xf32> to vector<4x256xf32>
    %26 = vector.broadcast %cst_7 : f32 to vector<4x256xf32>
    %27 = arith.select %23, %25, %26 : vector<4x256xi1>, vector<4x256xf32>
    %28 = vector.broadcast %10 : vector<1x256xi32> to vector<4x256xi32>
    %29 = arith.cmpi eq, %21, %28 : vector<4x256xi32>
    %cst_8 = arith.constant 1.000000e+00 : f32
    %30 = vector.broadcast %cst_8 : f32 to vector<1x256xf32>
    %31 = arith.subf %30, %11 : vector<1x256xf32>
    %cst_9 = arith.constant 0.000000e+00 : f32
    %32 = vector.shape_cast %31 : vector<1x256xf32> to vector<1x256xf32>
    %33 = vector.broadcast %32 : vector<1x256xf32> to vector<4x256xf32>
    %34 = vector.broadcast %cst_9 : f32 to vector<4x256xf32>
    %35 = arith.select %29, %33, %34 : vector<4x256xi1>, vector<4x256xf32>
    %36 = arith.addf %27, %35 : vector<4x256xf32>
    %37 = arith.mulf %4, %36 : vector<4x256xf32>
    %cst_10 = arith.constant dense<0.000000e+00> : vector<256xf32>
    %38 = vector.multi_reduction <add>, %37, %cst_10 [0] : vector<4x256xf32> to vector<256xf32>
    %39 = vector.shape_cast %38 : vector<256xf32> to vector<1x256xf32>
    %40 = arith.subf %20, %39 : vector<1x256xf32>
    %c0_11 = arith.constant 0 : index
    %c0_12 = arith.constant 0 : index
    %c0_13 = arith.constant 0 : index
    %41 = vector.load %arg5[%c0_11, %c0_12, %c0_13] : memref<1x1x256xf32, #tpu.memory_space<vmem>>, vector<1x1x256xf32>
    %42 = vector.shape_cast %41 : vector<1x1x256xf32> to vector<1x256xf32>
    %43 = arith.addf %42, %40 : vector<1x256xf32>
    %c0_14 = arith.constant 0 : index
    %c0_15 = arith.constant 0 : index
    %c0_16 = arith.constant 0 : index
    %44 = vector.load %arg5[%c0_14, %c0_15, %c0_16] : memref<1x1x256xf32, #tpu.memory_space<vmem>>, vector<1x1x256xf32>
    %45 = vector.shape_cast %44 : vector<1x1x256xf32> to vector<1x256xf32>
    %46 = vector.shape_cast %43 : vector<1x256xf32> to vector<1x1x256xf32>
    tpu.vector_store %arg5[%c0_14, %c0_15, %c0_16], %46 {strides = array<i32>} : memref<1x1x256xf32, #tpu.memory_space<vmem>>, vector<1x1x256xf32>,
    return
  }
  func.func @transform_0(%arg0: i32, %arg1: i32, %arg2: i32) -> (i32, i32, i32) {
    %c1_i32 = arith.constant 1 : i32
    %0 = arith.muli %arg1, %c1_i32 : i32
    %1 = arith.addi %0, %arg2 : i32
    %c0_i32 = arith.constant 0 : i32
    %c0_i32_0 = arith.constant 0 : i32
    return %arg0, %c0_i32, %1 : i32, i32, i32
  }
  func.func @transform_1(%arg0: i32, %arg1: i32, %arg2: i32) -> (i32, i32, i32) {
    %c1_i32 = arith.constant 1 : i32
    %0 = arith.muli %arg1, %c1_i32 : i32
    %1 = arith.addi %0, %arg2 : i32
    %c0_i32 = arith.constant 0 : i32
    %c0_i32_0 = arith.constant 0 : i32
    return %arg0, %c0_i32, %1 : i32, i32, i32
  }
  func.func @transform_2(%arg0: i32, %arg1: i32, %arg2: i32) -> (i32, i32, i32) {
    %c0_i32 = arith.constant 0 : i32
    %c0_i32_0 = arith.constant 0 : i32
    return %arg0, %arg1, %c0_i32 : i32, i32, i32
  }
}

</mosaic_0001>

<llo_original>
// kernel: tpu_custom_call.1
$region0: #{tpu_custom_call.1}
  #allocation0 [shape = 'u32[]', space=smem, size = 0x4, offset = 0x4, fixed_abs, tag = 'smem constant byte address 0x4 - core index']
  #allocation1 [shape = 'u32[144,128]{1,0:T(1,128)}', space=vmem, size = 0x12000, scoped, tag = 'internal scratch']
  %s0 = inlined_call_operand.vmem [shape: f32[2,4,256], index: 0, kind: input, shape index: {}]
  %s1 = inlined_call_operand.vmem [shape: f32[2,3,256], index: 1, kind: input, shape index: {}]
  %s2 = inlined_call_operand.hbm [shape: f32[2,1,256], index: 2, kind: output, shape index: {}]
  %s3 = sld [smem:[#allocation0]]
  $region45: #{tpu_custom_call.1} parent=0
    _
  %s5 = ssub.s32 1, %s3
  %s6 = scalar_select 0, %s5, %s3
  $region1: #{tpu_custom_call.1} parent=0
    #allocation2 [shape = 'u8[2048]{0}', space=vmem, size = 0x800, scoped, tag = 'output window, operand 0']
    #allocation3 [shape = 's32[2]{0}', space=sflag, size = 0x8, scoped, tag = 'scoped memory for tpu_custom_call.1']
    %7 = vsyncpa [#allocation3], 0
    %s8 = scalar_lea.sflag [#allocation3], 1
    %9 = vsyncpa %s8, 0
    loop: start=0, step=1, limit=4
    $region2: #{tpu_custom_call.1} parent=1 // loop_pre_header
      _
    $region3: #{tpu_custom_call.1} parent=1 // loop_header
      %s11 = sphi 0, %s15
      %p12 = scmp.ge.s32.totalorder %s11, 4
      %s18 = sphi 0, %s37
      %s19 = sphi 0, %s33
      %s20 = sphi 0, %s29
      %s21 = sphi 0, %s18
      %s22 = sphi 0, %s19
      %s23 = sphi 0, %s20
      %s24 = sphi 0, %s21
      %s25 = sphi 0, %s22
      %s26 = sphi 0, %s23
      %s44 = sphi 0, %s46
      %s47 = sphi 0, %s44
      %s48 = sphi 0, %s47
      %s64 = sphi 0, %s48
      %s74 = sphi 0, %s76
      %s77 = sphi 0, %s74
      %s78 = sphi 0, %s77
      %s94 = sphi 0, %s78
      %s102 = sphi 0, %s104
      %s105 = sphi 0, %s102
      %s106 = sphi 0, %s105
      %s122 = sphi 0, %s106
    $region4: #{tpu_custom_call.1} parent=1 // loop_header_branch
      %14 = sbr.rel (%p12) target = $region8
    $region5: #{tpu_custom_call.1} parent=1 // loop_body
      %s16 = ssub.s32 %s11, 1
      %s17 = ssub.s32 %s11, 2
      %s27 = sadd.s32 1, %s20
      %p28 = scmp.ge.s32.totalorder %s27, 1
      %s29 = scalar_select %p28, 0, %s27
      %s30 = sadd.s32 1, %s19
      %s31 = scalar_select %p28, %s30, %s19
      %p32 = scmp.ge.s32.totalorder %s31, 1
      %s33 = scalar_select %p32, 0, %s31
      %s34 = sadd.s32 1, %s18
      %s35 = scalar_select %p32, %s34, %s18
      %p36 = scmp.ge.s32.totalorder %s35, 2
      %s37 = scalar_select %p36, 0, %s35
      %s38 = sadd.s32 %s19, %s20
      %s39 = sadd.s32 %s33, %s29
      %s40 = ssub.s32 %s18, %s37
      %s41 = ssub.s32 %s38, %s39
      %s42 = sor.u32 %s40, %s41
      %p43 = scmp.eq.s32.totalorder %s42, 0
      %s45 = sadd.s32 %s44, 1
      %s46 = scalar_select %p43, %s44, %s45
      %p49 = pneg %p43
      %p50 = scmp.eq.s32.totalorder %s11, 1
      %p51 = por %p49, %p50
      %p52 = scmp.ne.s32.totalorder %s44, %s47
      %p53 = scmp.eq.s32.totalorder %s11, 0
      %p54 = por %p52, %p53
      %p55 = scmp.ne.s32.totalorder %s44, %s47
      %p56 = scmp.eq.s32.totalorder %s16, 1
      %p57 = por %p55, %p56
      %p58 = scmp.ne.s32.totalorder %s47, %s48
      %p59 = scmp.eq.s32.totalorder %s16, 0
      %p60 = por %p58, %p59
      %p61 = scmp.ne.s32.totalorder %s47, %s48
      %p62 = scmp.eq.s32.totalorder %s17, 1
      %p63 = por %p61, %p62
      %p65 = scmp.ne.s32.totalorder %s48, %s64
      %p66 = scmp.eq.s32.totalorder %s17, 0
      %p67 = por %p65, %p66
      %s68 = sadd.s32 %s19, %s20
      %s69 = sadd.s32 %s33, %s29
      %s70 = ssub.s32 %s18, %s37
      %s71 = ssub.s32 %s68, %s69
      %s72 = sor.u32 %s70, %s71
      %p73 = scmp.eq.s32.totalorder %s72, 0
      %s75 = sadd.s32 %s74, 1
      %s76 = scalar_select %p73, %s74, %s75
      %p79 = pneg %p73
      %p80 = scmp.eq.s32.totalorder %s11, 1
      %p81 = por %p79, %p80
      %p82 = scmp.ne.s32.totalorder %s74, %s77
      %p83 = scmp.eq.s32.totalorder %s11, 0
      %p84 = por %p82, %p83
      %p85 = scmp.ne.s32.totalorder %s74, %s77
      %p86 = scmp.eq.s32.totalorder %s16, 1
      %p87 = por %p85, %p86
      %p88 = scmp.ne.s32.totalorder %s77, %s78
      %p89 = scmp.eq.s32.totalorder %s16, 0
      %p90 = por %p88, %p89
      %p91 = scmp.ne.s32.totalorder %s77, %s78
      %p92 = scmp.eq.s32.totalorder %s17, 1
      %p93 = por %p91, %p92
      %p95 = scmp.ne.s32.totalorder %s78, %s94
      %p96 = scmp.eq.s32.totalorder %s17, 0
      %p97 = por %p95, %p96
      %s98 = ssub.s32 %s18, %s37
      %s99 = ssub.s32 %s19, %s33
      %s100 = sor.u32 %s98, %s99
      %p101 = scmp.eq.s32.totalorder %s100, 0
      %s103 = sadd.s32 %s102, 1
      %s104 = scalar_select %p101, %s102, %s103
      %p107 = pneg %p101
      %p108 = scmp.eq.s32.totalorder %s11, 1
      %p109 = por %p107, %p108
      %p110 = scmp.ne.s32.totalorder %s102, %s105
      %p111 = scmp.eq.s32.totalorder %s11, 0
      %p112 = por %p110, %p111
      %p113 = scmp.ne.s32.totalorder %s102, %s105
      %p114 = scmp.eq.s32.totalorder %s16, 1
      %p115 = por %p113, %p114
      %p116 = scmp.ne.s32.totalorder %s105, %s106
      %p117 = scmp.eq.s32.totalorder %s16, 0
      %p118 = por %p116, %p117
      %p119 = scmp.ne.s32.totalorder %s105, %s106
      %p120 = scmp.eq.s32.totalorder %s17, 1
      %p121 = por %p119, %p120
      %p123 = scmp.ne.s32.totalorder %s106, %s122
      %p124 = scmp.eq.s32.totalorder %s17, 0
      %p125 = por %p123, %p124
      %p126 = scmp.le.s32.totalorder 1, %s11
      %p127 = scmp.lt.s32.totalorder %s11, 3
      %p128 = pnand %p126, %p127
      %p129 = pneg %p128
      // Predicated region
      $region9: #{tpu_custom_call.1} parent=5 // pred_check
        _
      $region10: #{tpu_custom_call.1} parent=5 // pred_check_branch
        %131 = sbr.rel (%p128) target = $region12
      $region11: #{tpu_custom_call.1} parent=5 // pred_region
        %s132 = ssub.s32 %s11, 1
      $region12: #{tpu_custom_call.1} parent=5 // pred_fallthru
        _
      %p133 = scmp.lt.s32.totalorder %s11, 2
      // Predicated region
      $region13: #{tpu_custom_call.1} parent=5 // pred_check
        %p134 = pneg %p133
      $region14: #{tpu_custom_call.1} parent=5 // pred_check_branch
        %136 = sbr.rel (%p134) target = $region16
      $region15: #{tpu_custom_call.1} parent=5 // pred_region
        // Predicated region
        $region17: #{tpu_custom_call.1} parent=15 // pred_check
          %p137 = pneg %p54
        $region18: #{tpu_custom_call.1} parent=15 // pred_check_branch
          %139 = sbr.rel (%p137) target = $region20
        $region19: #{tpu_custom_call.1} parent=15 // pred_region
          %s140 = sadd.s32 %s19, %s20
          %s141 = smul.u32 2, %s140
          %p142 = scmp.lt.s32.totalorder %s18, 1
          %s143 = scalar_select %p142, %s18, 1
          %p144 = scmp.lt.s32.totalorder %s141, 1
          %s145 = scalar_select %p144, %s141, 1
          %s146 = smul.addr %s143, 2
          %s147 = sadd.s32 %s145, %s146
          %s148 = smul.addr %s147, 4
          %s149 = scalar_lea.vmem %s0, %s148
          %s150 = sadd.s32 %s19, %s20
          %s151 = smul.u32 2, %s150
        $region20: #{tpu_custom_call.1} parent=15 // pred_fallthru
          _
        // Predicated region
        $region21: #{tpu_custom_call.1} parent=15 // pred_check
          %p152 = pneg %p84
        $region22: #{tpu_custom_call.1} parent=15 // pred_check_branch
          %154 = sbr.rel (%p152) target = $region24
        $region23: #{tpu_custom_call.1} parent=15 // pred_region
          %s155 = sadd.s32 %s19, %s20
          %s156 = smul.u32 2, %s155
          %p157 = scmp.lt.s32.totalorder %s18, 1
          %s158 = scalar_select %p157, %s18, 1
          %p159 = scmp.lt.s32.totalorder %s156, 1
          %s160 = scalar_select %p159, %s156, 1
          %s161 = smul.addr %s158, 2
          %s162 = sadd.s32 %s160, %s161
          %s163 = smul.addr %s162, 4
          %s164 = scalar_lea.vmem %s1, %s163
          %s165 = sadd.s32 %s19, %s20
          %s166 = smul.u32 2, %s165
        $region24: #{tpu_custom_call.1} parent=15 // pred_fallthru
          _
      $region16: #{tpu_custom_call.1} parent=5 // pred_fallthru
        _
      %p167 = scmp.le.s32.totalorder 1, %s11
      %p168 = scmp.lt.s32.totalorder %s11, 3
      %p169 = pnand %p167, %p168
      %p170 = pneg %p169
      // Predicated region
      $region25: #{tpu_custom_call.1} parent=5 // pred_check
        _
      $region26: #{tpu_custom_call.1} parent=5 // pred_check_branch
        %172 = sbr.rel (%p169) target = $region28
      $region27: #{tpu_custom_call.1} parent=5 // pred_region
        %s173 = ssub.s32 %s11, 1
        %s174 = sadd.s32 %s22, %s23
        %s175 = smul.u32 2, %s174
        %p176 = scmp.lt.s32.totalorder %s21, 1
        %s177 = scalar_select %p176, %s21, 1
        %p178 = scmp.lt.s32.totalorder %s175, 1
        %s179 = scalar_select %p178, %s175, 1
        %s180 = smul.addr %s177, 2
        %s181 = sadd.s32 %s179, %s180
        %s182 = smul.addr %s181, 4
        %s183 = scalar_lea.vmem %s0, %s182
        %p184 = pneg %p60
        %p185 = pneg %p57
        %s186 = sadd.s32 %s22, %s23
        %s187 = smul.u32 2, %s186
        %p188 = scmp.lt.s32.totalorder %s21, 1
        %s189 = scalar_select %p188, %s21, 1
        %p190 = scmp.lt.s32.totalorder %s187, 1
        %s191 = scalar_select %p190, %s187, 1
        %s192 = smul.addr %s189, 2
        %s193 = sadd.s32 %s191, %s192
        %s194 = smul.addr %s193, 4
        %s195 = scalar_lea.vmem %s1, %s194
        %p196 = pneg %p90
        %p197 = pneg %p87
        %p198 = pneg %p118
        %p199 = pneg %p115
        %s200 = sand.u32 %s105, 1
        %s201 = scalar_lea.sflag [#allocation3], %s200
        %s202 = sand.u32 %s105, 1
        %s203 = smul.addr %s202, 2
        %s204 = scalar_lea.vmem [#allocation2], %s203
        %s205 = sadd.s32 %s22, %s23
        %s206 = smul.u32 2, %s205
        %p207 = scmp.lt.s32.totalorder %s21, 1
        %s208 = scalar_select %p207, %s21, 1
        %p209 = scmp.lt.s32.totalorder %s206, 1
        %s210 = scalar_select %p209, %s206, 1
        %s211 = smul.addr %s208, 2
        %s212 = sadd.s32 %s210, %s211
        %s213 = smul.addr %s212, 4
        %s214 = scalar_lea.vmem %s0, %s213
        %s215 = sadd.s32 %s22, %s23
        %s216 = smul.u32 2, %s215
        %s217 = sadd.s32 %s22, %s23
        %s218 = smul.u32 2, %s217
        %p219 = scmp.lt.s32.totalorder %s21, 1
        %s220 = scalar_select %p219, %s21, 1
        %p221 = scmp.lt.s32.totalorder %s218, 1
        %s222 = scalar_select %p221, %s218, 1
        %s223 = smul.addr %s220, 2
        %s224 = sadd.s32 %s222, %s223
        %s225 = smul.addr %s224, 4
        %s226 = scalar_lea.vmem %s1, %s225
        %s227 = sadd.s32 %s22, %s23
        %s228 = smul.u32 2, %s227
        %p229 = scmp.eq.s32.totalorder %s23, 0
        // Predicated region
        $region29: #{tpu_custom_call.1} parent=27 // pred_check
          %p230 = pneg %p229
        $region30: #{tpu_custom_call.1} parent=27 // pred_check_branch
          %232 = sbr.rel (%p230) target = $region32
        $region31: #{tpu_custom_call.1} parent=27 // pred_region
          %v233 = vlaneseq
          %vm234 = vcmp.ge.s32.totalorder %v233, 0
          %vm235 = vcmp.lt.s32.totalorder %v233, 256
          %vm236 = vmand %vm234, %vm235
          %237 = vst.msk [vmem:[%s204] sm:$0x3] %vm236, 0.0
        $region32: #{tpu_custom_call.1} parent=27 // pred_fallthru
          _
        %v238 = vld [vmem:[%s214] sm:$0xff]
        %v239 = vld [vmem:[%s226] sm:$0x77]
        %v240 = vcvt.f32.s32.to.zero.pseudo %v239
        %v242 = vcombine.high %v238, %v238
        %vm244 = vcmask 1043456
        %v245 = vsel %vm244, %v238, -inf
        %v246 = vrot.slane %v245, 4
        %v247 = vmax.f32 %v245, %v246
        %v248 = vrot.slane %v247, 2
        %v249 = vmax.f32 %v247, %v248
        %v250 = vrot.slane %v249, 1
        %v251 = vmax.f32 %v249, %v250
        %v252 = vsel %vm244, %v242, -inf
        %v253 = vrot.slane %v252, 4
        %v254 = vmax.f32 %v252, %v253
        %v255 = vrot.slane %v254, 2
        %v256 = vmax.f32 %v254, %v255
        %v257 = vrot.slane %v256, 1
        %v258 = vmax.f32 %v256, %v257
        %v261 = vcombine.low %v251, %v258
        %v263 = vsub.f32 %v238, %v261
        %v264 = vmul.f32 %v263, 1.442695
        %v265 = vpow.pop %v264
        %v267 = vcombine.high %v265, %v265
        %v269 = vsel %vm244, %v265, 0.0
        %v270 = vrot.slane %v269, 4
        %v271 = vadd.f32 %v269, %v270
        %v272 = vrot.slane %v271, 2
        %v273 = vadd.f32 %v271, %v272
        %v274 = vrot.slane %v273, 1
        %v275 = vadd.f32 %v273, %v274
        %v276 = vsel %vm244, %v267, 0.0
        %v277 = vrot.slane %v276, 4
        %v278 = vadd.f32 %v276, %v277
        %v279 = vrot.slane %v278, 2
        %v280 = vadd.f32 %v278, %v279
        %v281 = vrot.slane %v280, 1
        %v282 = vadd.f32 %v280, %v281
        %v283 = vlog2.pop %v275
        %v284 = vmul.f32 %v283, 0.6931472
        %v285 = vlog2.pop %v282
        %v286 = vmul.f32 %v285, 0.6931472
        %v287 = vadd.f32 %v251, %v284
        %v288 = vadd.f32 %v258, %v286
        %v289 = vlaneseq
        %v290 = vshrl.u32 %v289, 7
        %v291 = vlaneseq
        %v292 = vshrl.u32 %v291, 7
        %v293 = vsub.s32 0, %v292
        %v294 = vrot.slane %v240, %v293
        %v295 = vlaneseq
        %v296 = vshrl.u32 %v295, 7
        %v297 = vsub.s32 4, %v296
        %v298 = vrot.slane %v240, %v297
        %v299 = vlaneseq
        %v300 = vshrl.u32 %v299, 7
        %v301 = vsub.s32 0, %v300
        %v302 = vrot.slane %v294, %v301
        %v303 = vlaneseq
        %v304 = vshrl.u32 %v303, 7
        %v305 = vsub.s32 0, %v304
        %v306 = vrot.slane %v298, %v305
        %vm307 = vcmp.eq.s32.totalorder %v290, %v302
        %vm308 = vcmp.eq.s32.totalorder %v290, %v306
        %v310 = vlaneseq
        %v311 = vshrl.u32 %v310, 7
        %v312 = vsub.s32 2, %v311
        %v313 = vrot.slane %v239, %v312
        %v314 = vlaneseq
        %v315 = vshrl.u32 %v314, 7
        %v316 = vsub.s32 6, %v315
        %v317 = vrot.slane %v239, %v316
        %v320 = vlaneseq
        %v321 = vshrl.u32 %v320, 7
        %v322 = vsub.s32 2, %v321
        %v323 = vrot.slane %v313, %v322
        %v324 = vlaneseq
        %v325 = vshrl.u32 %v324, 7
        %v326 = vsub.s32 2, %v325
        %v327 = vrot.slane %v317, %v326
        %v328 = vsel %vm307, %v323, 0.0
        %v329 = vsel %vm308, %v327, 0.0
        %v330 = vlaneseq
        %v331 = vshrl.u32 %v330, 7
        %v332 = vsub.s32 1, %v331
        %v333 = vrot.slane %v240, %v332
        %v334 = vlaneseq
        %v335 = vshrl.u32 %v334, 7
        %v336 = vsub.s32 5, %v335
        %v337 = vrot.slane %v240, %v336
        %v338 = vlaneseq
        %v339 = vshrl.u32 %v338, 7
        %v340 = vsub.s32 1, %v339
        %v341 = vrot.slane %v333, %v340
        %v342 = vlaneseq
        %v343 = vshrl.u32 %v342, 7
        %v344 = vsub.s32 1, %v343
        %v345 = vrot.slane %v337, %v344
        %vm346 = vcmp.eq.s32.totalorder %v290, %v341
        %vm347 = vcmp.eq.s32.totalorder %v290, %v345
        %v348 = vsub.f32 1.0, %v239
        %v350 = vlaneseq
        %v351 = vshrl.u32 %v350, 7
        %v352 = vsub.s32 2, %v351
        %v353 = vrot.slane %v348, %v352
        %v354 = vlaneseq
        %v355 = vshrl.u32 %v354, 7
        %v356 = vsub.s32 6, %v355
        %v357 = vrot.slane %v348, %v356
        %v360 = vlaneseq
        %v361 = vshrl.u32 %v360, 7
        %v362 = vsub.s32 2, %v361
        %v363 = vrot.slane %v353, %v362
        %v364 = vlaneseq
        %v365 = vshrl.u32 %v364, 7
        %v366 = vsub.s32 2, %v365
        %v367 = vrot.slane %v357, %v366
        %v368 = vsel %vm346, %v363, 0.0
        %v369 = vsel %vm347, %v367, 0.0
        %v370 = vadd.f32 %v328, %v368
        %v371 = vadd.f32 %v329, %v369
        %v374 = vcombine.low %v370, %v371
        %v376 = vmul.f32 %v238, %v374
        %v378 = vcombine.high %v376, %v376
        %v380 = vsel %vm244, %v376, 0.0
        %v381 = vrot.slane %v380, 4
        %v382 = vadd.f32 %v380, %v381
        %v383 = vrot.slane %v382, 2
        %v384 = vadd.f32 %v382, %v383
        %v385 = vrot.slane %v384, 1
        %v386 = vadd.f32 %v384, %v385
        %v387 = vsel %vm244, %v378, 0.0
        %v388 = vrot.slane %v387, 4
        %v389 = vadd.f32 %v387, %v388
        %v390 = vrot.slane %v389, 2
        %v391 = vadd.f32 %v389, %v390
        %v392 = vrot.slane %v391, 1
        %v393 = vadd.f32 %v391, %v392
        %v394 = vsub.f32 %v287, %v386
        %v395 = vsub.f32 %v288, %v393
        %v396 = vld [vmem:[%s204] sm:$0x3]
        %v399 = vcombine.low %v394, %v395
        %v401 = vunpack.c.l.s4 1966171168
        %v402 = vunpack.c.0.s8 %v401
        %v403 = vlaneseq
        %v404 = vshrl.u32 %v403, 7
        %v405 = vsub.s32 %v402, %v404
        %v406 = vrot.slane %v399, %v405
        %v408 = vunpack.c.l.s4 1966171168
        %v409 = vunpack.c.0.s8 %v408
        %v410 = vlaneseq
        %v411 = vshrl.u32 %v410, 7
        %v412 = vsub.s32 %v409, %v411
        %v413 = vrot.slane %v406, %v412
        %v415 = vadd.f32 %v396, %v413
        %v416 = vlaneseq
        %vm417 = vcmp.ge.s32.totalorder %v416, 0
        %vm418 = vcmp.lt.s32.totalorder %v416, 256
        %vm419 = vmand %vm417, %vm418
        %420 = vst.msk [vmem:[%s204] sm:$0x3] %vm419, %v415
        %s421 = sand.u32 %s105, 1
        %s422 = scalar_lea.sflag [#allocation3], %s421
        %s423 = sand.u32 %s105, 1
        %s424 = smul.addr %s423, 2
        %s425 = scalar_lea.vmem [#allocation2], %s424
        // Predicated region
        $region33: #{tpu_custom_call.1} parent=27 // pred_check
          %p426 = pneg %p115
        $region34: #{tpu_custom_call.1} parent=27 // pred_check_branch
          %428 = sbr.rel (%p426) target = $region36
        $region35: #{tpu_custom_call.1} parent=27 // pred_region
          %s430 = ssub.s32 32, 32
          %431 = vsyncadd %s422, %s430
          %s432 = smul.addr %s22, 2
          %s433 = smul.addr %s21, 2
          %s434 = sadd.s32 %s432, %s433
          %s435 = smul.addr %s434, 16
          %s436 = scalar_lea.hbm %s2, %s435
          %s438 = sshll.u32 %s425, 4
          %s439 = int_to_ptr.vmem [resolvable:$true] %s438
          %441 = dma.vmem_to_hbm [thread:$0]  %s439, 32, %s436, %s422
        $region36: #{tpu_custom_call.1} parent=27 // pred_fallthru
          _
      $region28: #{tpu_custom_call.1} parent=5 // pred_fallthru
        _
      %p442 = scmp.le.s32.totalorder 2, %s11
      // Predicated region
      $region37: #{tpu_custom_call.1} parent=5 // pred_check
        %p443 = pneg %p442
      $region38: #{tpu_custom_call.1} parent=5 // pred_check_branch
        %445 = sbr.rel (%p443) target = $region40
      $region39: #{tpu_custom_call.1} parent=5 // pred_region
        %s446 = ssub.s32 %s11, 2
        // Predicated region
        $region41: #{tpu_custom_call.1} parent=39 // pred_check
          %p447 = pneg %p121
        $region42: #{tpu_custom_call.1} parent=39 // pred_check_branch
          %449 = sbr.rel (%p447) target = $region44
        $region43: #{tpu_custom_call.1} parent=39 // pred_region
          %s450 = sand.u32 %s106, 1
          %s451 = scalar_lea.sflag [#allocation3], %s450
          %s452 = sand.u32 %s106, 1
          %s453 = smul.addr %s452, 2
          %s454 = scalar_lea.vmem [#allocation2], %s453
          %455 = dma.done %s451, 32
        $region44: #{tpu_custom_call.1} parent=39 // pred_fallthru
          _
      $region40: #{tpu_custom_call.1} parent=5 // pred_fallthru
        _
    $region6: #{tpu_custom_call.1} parent=1 // loop_footer
      %s15 = sadd.s32 1, %s11
    $region7: #{tpu_custom_call.1} parent=1 // loop_footer_branch
      %10 = sbr.rel target = $region3
    $region8: #{tpu_custom_call.1} parent=1 // loop_exit
      _
    %456 = vsyncpa [#allocation3], 1
    %s457 = scalar_lea.sflag [#allocation3], 1
    %458 = vsyncpa %s457, 1

</llo_original>
